<compile_context>
chip_gen: v6e
topology: v6e:2x2x1
jax: 0.10.0
libtpu: 0.0.40
codegen_flags: <defaults>
</compile_context>

<pallas_src>
import jax
import jax.numpy as jnp
from jax.experimental import pallas as pl
from jax.experimental.pallas import tpu as pltpu


def _round_up(x, m):
    return ((x + m - 1) // m) * m


# ----------------------------------------------------------------------------
# Pallas kernel
# ----------------------------------------------------------------------------
def _make_kernel(self_state_dim, lstm_hidden_dim, seq_len, n_mlp_layers,
                 mxu_dtype):
    S, H, T = self_state_dim, lstm_hidden_dim, seq_len

    def kernel(x_ref, self_ref, wih_ref, whh_ref, b_ref, *rest):
        # rest = [w1_self, w1_hid, b1, w2, b2, ..., wN, bN, out_ref]
        mlp_refs = rest[:-1]
        out_ref = rest[-1]

        Bblk = x_ref.shape[1]          # batch rows in this block (multiple of 8)
        D = x_ref.shape[2]

        # ---- hoisted input projection (off the recurrent critical path) ----
        # x is already time-major; Bblk % 8 == 0 so this reshape is a layout
        # no-op (pure leading-dim merge over aligned (8, 128) tiles).
        x = x_ref[...].reshape(T * Bblk, D)
        xw = jnp.dot(x.astype(mxu_dtype), wih_ref[...],
                     preferred_element_type=jnp.float32) + b_ref[...]
        xw = xw.reshape(T, Bblk, 4 * H)          # (T, Bblk, 4H)

        whh = whh_ref[...]                       # (H, 4H), already mxu_dtype

        # ---- LSTM recurrence, fully unrolled (PyTorch gate order i,f,g,o) --
        h = None
        c = None
        for t in range(T):
            pre = xw[t]                          # (Bblk, 4H), tile-aligned
            if t == 0:
                gates = pre                      # h0 == c0 == 0 -> skip h @ whh
            else:
                gates = pre + jnp.dot(h.astype(mxu_dtype), whh,
                                      preferred_element_type=jnp.float32)
            # Single EUP pass for all four gates: i/f/o pre-activations were
            # pre-scaled by 0.5 on the host, so sigmoid(z) = 0.5*tanh(z/2)+0.5.
            tg = jnp.tanh(gates)                 # (Bblk, 4H)
            i_g = 0.5 * tg[:, 0 * H:1 * H] + 0.5
            f_g = 0.5 * tg[:, 1 * H:2 * H] + 0.5
            g_g = tg[:, 2 * H:3 * H]
            o_g = 0.5 * tg[:, 3 * H:4 * H] + 0.5
            c = i_g * g_g if t == 0 else f_g * c + i_g * g_g
            h = o_g * jnp.tanh(c)

        # ---- joint state = cat([self_state, h_n], dim=1) --------------------
        # Implemented by splitting the first MLP weight (done on the host):
        # cat(s, h) @ [Ws; Wh] == s @ Ws + h @ Wh  -> no in-kernel concat.
        w1s, w1h, b1 = mlp_refs[0], mlp_refs[1], mlp_refs[2]
        act = (
            jnp.dot(self_ref[...], w1s[...], preferred_element_type=jnp.float32)
            + jnp.dot(h, w1h[...], preferred_element_type=jnp.float32)
            + b1[...]
        )

        # ---- remaining MLP layers (ReLU between layers, none after last) ----
        layer_refs = mlp_refs[3:]
        for li in range(n_mlp_layers - 1):
            act = jnp.maximum(act, 0.0)
            act = (jnp.dot(act, layer_refs[2 * li][...],
                           preferred_element_type=jnp.float32)
                   + layer_refs[2 * li + 1][...])

        # out_dim is typically 1 -> masked vst; byte count is tiny, accepted.
        out_ref[...] = act.astype(out_ref.dtype)

    return kernel


# ----------------------------------------------------------------------------
# Host-side parameter preparation (done ONCE per network, not per call)
# ----------------------------------------------------------------------------
def _prepare_params(params, self_state_dim, lstm_hidden_dim, mxu_dtype):
    S, H = self_state_dim, lstm_hidden_dim
    w_ih = jnp.asarray(params["w_ih"], jnp.float32)     # (D, 4H)
    w_hh = jnp.asarray(params["w_hh"], jnp.float32)     # (H, 4H)
    b = jnp.asarray(params["b"], jnp.float32)           # (1, 4H) = b_ih + b_hh

    # Fold the sigmoid-via-tanh identity into the i/f/o gate columns
    # (0.5 scale is exact in f32: power-of-two).  Gate order: i, f, g, o.
    scale = jnp.concatenate([jnp.full((H,), 0.5, jnp.float32),
                             jnp.full((H,), 0.5, jnp.float32),
                             jnp.ones((H,), jnp.float32),
                             jnp.full((H,), 0.5, jnp.float32)])
    wih = (w_ih * scale[None, :]).astype(mxu_dtype)
    whh = (w_hh * scale[None, :]).astype(mxu_dtype)
    bias = b * scale[None, :]                            # stays f32 (post-acc add)

    mlp_ws = [jnp.asarray(w, jnp.float32) for w in params["mlp_ws"]]
    mlp_bs = [jnp.asarray(bb, jnp.float32) for bb in params["mlp_bs"]]
    w1 = mlp_ws[0]                                       # (S + H, M1)
    mlp = [w1[:S, :], w1[S:, :], mlp_bs[0]]
    for li in range(1, len(mlp_ws)):
        mlp += [mlp_ws[li], mlp_bs[li]]

    return {"wih": wih, "whh": whh, "b": bias, "mlp": tuple(mlp),
            "n_layers": len(mlp_ws), "out_dim": int(mlp_ws[-1].shape[1])}


# ----------------------------------------------------------------------------
# Forward implementation (called under jit)
# ----------------------------------------------------------------------------
def _forward(state, prepared, self_state_dim, lstm_hidden_dim, batch_block,
             mxu_dtype):
    B, T, D = state.shape
    S, H = self_state_dim, lstm_hidden_dim
    state = state.astype(jnp.float32)

    # Batch block: multiple of 8 (sublane-aligned); one block for tiny B,
    # multi-block "parallel" grid for large RL batches (uses both v7x TCs and
    # keeps the per-block working set far below the v7x 64 MiB VMEM ceiling).
    Bblk = min(_round_up(max(B, 1), 8), batch_block)
    B_pad = _round_up(B, Bblk)

    # Layout plumbing in the wrapper (fused by XLA), not in the kernel.
    self_state = state[:, 0, :S]                          # (B, S)
    if B_pad != B:
        state = jnp.pad(state, ((0, B_pad - B), (0, 0), (0, 0)))
        self_state = jnp.pad(self_state, ((0, B_pad - B), (0, 0)))
    x_tm = jnp.transpose(state, (1, 0, 2))                # (T, B_pad, D)

    wih, whh, bias = prepared["wih"], prepared["whh"], prepared["b"]
    mlp = prepared["mlp"]
    n_layers = prepared["n_layers"]
    out_dim = prepared["out_dim"]

    inputs = [x_tm, self_state, wih, whh, bias] + list(mlp)

    in_specs = [
        pl.BlockSpec((T, Bblk, D), lambda i: (0, i, 0)),   # x, blocked over batch
        pl.BlockSpec((Bblk, S), lambda i: (i, 0)),         # self_state
    ] + [
        # Weights / biases: constant index_map -> stay resident across blocks.
        pl.BlockSpec(a.shape, lambda i: (0, 0)) for a in inputs[2:]
    ]
    out_specs = pl.BlockSpec((Bblk, out_dim), lambda i: (i, 0))

    kernel = _make_kernel(S, H, T, n_layers, mxu_dtype)

    out = pl.pallas_call(
        kernel,
        out_shape=jax.ShapeDtypeStruct((B_pad, out_dim), jnp.float32),
        grid=(B_pad // Bblk,),
        in_specs=in_specs,
        out_specs=out_specs,
        compiler_params=pltpu.CompilerParams(
            dimension_semantics=("parallel",)),
    )(*inputs)
    return out[:B]


def make_value_network1(params, *, self_state_dim, lstm_hidden_dim,
                        batch_block=512, mxu_dtype=jnp.bfloat16):
    """Returns a jitted forward fn: state (B, T, D) -> value (B, out_dim).

    mxu_dtype: operand dtype for the LSTM matmuls (accumulation is always
    float32).  bfloat16 is the right default on v5e/v6e/v7x (f32 operands are
    multi-pass on the MXU); pass jnp.float32 for bit-tight checks.
    """
    prepared = _prepare_params(params, self_state_dim, lstm_hidden_dim,
                               mxu_dtype)

    def fwd(state):
        return _forward(state, prepared, self_state_dim, lstm_hidden_dim,
                        batch_block, mxu_dtype)

    return jax.jit(fwd)


# ----------------------------------------------------------------------------
# Pure-JAX reference (mirrors the PyTorch module math)
# ----------------------------------------------------------------------------
def value_network1_ref(state, params, *, self_state_dim, lstm_hidden_dim):
    B, T, D = state.shape
    H = lstm_hidden_dim
    S = self_state_dim
    wih, whh, b = params["w_ih"], params["w_hh"], params["b"]

    h = jnp.zeros((B, H), jnp.float32)
    c = jnp.zeros((B, H), jnp.float32)
    for t in range(T):
        xt = state[:, t, :]
        gates = xt @ wih + h @ whh + b
        i_g = jax.nn.sigmoid(gates[:, 0 * H:1 * H])
        f_g = jax.nn.sigmoid(gates[:, 1 * H:2 * H])
        g_g = jnp.tanh(gates[:, 2 * H:3 * H])
        o_g = jax.nn.sigmoid(gates[:, 3 * H:4 * H])
        c = f_g * c + i_g * g_g
        h = o_g * jnp.tanh(c)

    joint = jnp.concatenate([state[:, 0, :S], h], axis=1)
    act = joint
    n = len(params["mlp_ws"])
    for li in range(n):
        act = act @ params["mlp_ws"][li] + params["mlp_bs"][li]
        if li != n - 1:
            act = jnp.maximum(act, 0.0)
    return act


# ----------------------------------------------------------------------------
# Deterministic parameter construction (PyTorch-style uniform init)
# ----------------------------------------------------------------------------
def make_params(key, input_dim, self_state_dim, lstm_hidden_dim, mlp_dims):
    H = lstm_hidden_dim
    keys = jax.random.split(key, 6 + 2 * len(mlp_dims))
    k = iter(keys)

    lstm_bound = 1.0 / jnp.sqrt(H)
    w_ih = jax.random.uniform(next(k), (input_dim, 4 * H), jnp.float32,
                              -lstm_bound, lstm_bound)
    w_hh = jax.random.uniform(next(k), (H, 4 * H), jnp.float32,
                              -lstm_bound, lstm_bound)
    b_ih = jax.random.uniform(next(k), (1, 4 * H), jnp.float32,
                              -lstm_bound, lstm_bound)
    b_hh = jax.random.uniform(next(k), (1, 4 * H), jnp.float32,
                              -lstm_bound, lstm_bound)

    dims = [self_state_dim + H] + list(mlp_dims)
    mlp_ws, mlp_bs = [], []
    for i in range(len(dims) - 1):
        bound = 1.0 / jnp.sqrt(dims[i])
        mlp_ws.append(jax.random.uniform(next(k), (dims[i], dims[i + 1]),
                                         jnp.float32, -bound, bound))
        mlp_bs.append(jax.random.uniform(next(k), (1, dims[i + 1]),
                                         jnp.float32, -bound, bound))

    return {"w_ih": w_ih, "w_hh": w_hh, "b": b_ih + b_hh,
            "mlp_ws": mlp_ws, "mlp_bs": mlp_bs}


# ----------------------------------------------------------------------------
if __name__ == "__main__":
    # Shapes consistent with the CrowdNav LSTM-RL value network (small).
    batch = 2
    seq_len = 5                 # number of humans (sequence length)
    input_dim = 13              # self_state_dim + human_state_dim
    self_state_dim = 6
    lstm_hidden_dim = 32
    mlp_dims = [64, 32, 1]

    key = jax.random.PRNGKey(0)
    k_params, k_x, k_x2 = jax.random.split(key, 3)
    params = make_params(k_params, input_dim, self_state_dim,
                         lstm_hidden_dim, mlp_dims)
    state = jax.random.normal(k_x, (batch, seq_len, input_dim), jnp.float32)

    ref = value_network1_ref(state, params, self_state_dim=self_state_dim,
                             lstm_hidden_dim=lstm_hidden_dim)

    # 1) Strict f32 MXU-operand path, tiny batch (grid=(1,)).
    fwd_f32 = make_value_network1(params, self_state_dim=self_state_dim,
                                  lstm_hidden_dim=lstm_hidden_dim,
                                  mxu_dtype=jnp.float32)
    value = jax.block_until_ready(fwd_f32(state))
    assert value.shape == (batch, mlp_dims[-1])
    assert jnp.allclose(value, ref, atol=1e-4, rtol=1e-4)

    # 2) Multi-block batch grid (parallel axis -> both v7x TensorCores), f32.
    big_batch = 100
    state_big = jax.random.normal(k_x2, (big_batch, seq_len, input_dim),
                                  jnp.float32)
    ref_big = value_network1_ref(state_big, params,
                                 self_state_dim=self_state_dim,
                                 lstm_hidden_dim=lstm_hidden_dim)
    fwd_grid = make_value_network1(params, self_state_dim=self_state_dim,
                                   lstm_hidden_dim=lstm_hidden_dim,
                                   batch_block=32, mxu_dtype=jnp.float32)
    value_big = jax.block_until_ready(fwd_grid(state_big))
    assert value_big.shape == (big_batch, mlp_dims[-1])
    assert jnp.allclose(value_big, ref_big, atol=1e-4, rtol=1e-4)

    # 3) Production default: bf16 MXU operands (f32 accumulation), looser tol.
    fwd_bf16 = make_value_network1(params, self_state_dim=self_state_dim,
                                   lstm_hidden_dim=lstm_hidden_dim)
    value_bf16 = jax.block_until_ready(fwd_bf16(state))
    assert value_bf16.shape == (batch, mlp_dims[-1])
    assert bool(jnp.all(jnp.isfinite(value_bf16)))
    assert jnp.allclose(value_bf16, ref, atol=5e-2, rtol=5e-2)

    print("KERNEL_OK")
</pallas_src>

<mosaic_0001>
module attributes {stable_mosaic.version = 11 : i64} {
  func.func @kernel(%arg0: i32, %arg1: memref<5x8x13xf32, #tpu.memory_space<vmem>>, %arg2: memref<8x6xf32, #tpu.memory_space<vmem>>, %arg3: memref<13x128xf32, #tpu.memory_space<vmem>>, %arg4: memref<32x128xf32, #tpu.memory_space<vmem>>, %arg5: memref<1x128xf32, #tpu.memory_space<vmem>>, %arg6: memref<6x64xf32, #tpu.memory_space<vmem>>, %arg7: memref<32x64xf32, #tpu.memory_space<vmem>>, %arg8: memref<1x64xf32, #tpu.memory_space<vmem>>, %arg9: memref<64x32xf32, #tpu.memory_space<vmem>>, %arg10: memref<1x32xf32, #tpu.memory_space<vmem>>, %arg11: memref<32x1xf32, #tpu.memory_space<vmem>>, %arg12: memref<1x1xf32, #tpu.memory_space<vmem>>, %arg13: memref<8x1xf32, #tpu.memory_space<vmem>>) attributes {dimension_semantics = [#tpu.dimension_semantics<parallel>], iteration_bounds = array<i64: 1>, scalar_prefetch = 0 : i64, scratch_operands = 0 : i64, tpu.core_type = #tpu.core_type<tc>, window_params = [{transform_indices = @transform_0, window_bounds = array<i64: 5, 8, 13>}, {transform_indices = @transform_1, window_bounds = array<i64: 8, 6>}, {pipeline_mode = #tpu.pipeline_mode<synchronous>, transform_indices = @transform_2, window_bounds = array<i64: 13, 128>}, {pipeline_mode = #tpu.pipeline_mode<synchronous>, transform_indices = @transform_3, window_bounds = array<i64: 32, 128>}, {pipeline_mode = #tpu.pipeline_mode<synchronous>, transform_indices = @transform_4, window_bounds = array<i64: 1, 128>}, {pipeline_mode = #tpu.pipeline_mode<synchronous>, transform_indices = @transform_5, window_bounds = array<i64: 6, 64>}, {pipeline_mode = #tpu.pipeline_mode<synchronous>, transform_indices = @transform_6, window_bounds = array<i64: 32, 64>}, {pipeline_mode = #tpu.pipeline_mode<synchronous>, transform_indices = @transform_7, window_bounds = array<i64: 1, 64>}, {pipeline_mode = #tpu.pipeline_mode<synchronous>, transform_indices = @transform_8, window_bounds = array<i64: 64, 32>}, {pipeline_mode = #tpu.pipeline_mode<synchronous>, transform_indices = @transform_9, window_bounds = array<i64: 1, 32>}, {pipeline_mode = #tpu.pipeline_mode<synchronous>, transform_indices = @transform_10, window_bounds = array<i64: 32, 1>}, {pipeline_mode = #tpu.pipeline_mode<synchronous>, transform_indices = @transform_11, window_bounds = array<i64: 1, 1>}, {transform_indices = @transform_12, window_bounds = array<i64: 8, 1>}]} {
    %c0 = arith.constant 0 : index
    %c0_0 = arith.constant 0 : index
    %c0_1 = arith.constant 0 : index
    %0 = vector.load %arg1[%c0, %c0_0, %c0_1] : memref<5x8x13xf32, #tpu.memory_space<vmem>>, vector<5x8x13xf32>
    %1 = vector.shape_cast %0 : vector<5x8x13xf32> to vector<40x13xf32>
    %c0_2 = arith.constant 0 : index
    %c0_3 = arith.constant 0 : index
    %2 = vector.load %arg3[%c0_2, %c0_3] : memref<13x128xf32, #tpu.memory_space<vmem>>, vector<13x128xf32>
    %cst = arith.constant dense<0.000000e+00> : vector<40x128xf32>
    %3 = tpu.matmul %1, %2, %cst {dimension_numbers = #tpu.dot_dimension_numbers<[1], [0], [0], [1], [0, 0, 1, 1], [], []>} : vector<40x13xf32>, vector<13x128xf32>, vector<40x128xf32> -> vector<40x128xf32>
    %c0_4 = arith.constant 0 : index
    %c0_5 = arith.constant 0 : index
    %4 = vector.load %arg5[%c0_4, %c0_5] : memref<1x128xf32, #tpu.memory_space<vmem>>, vector<1x128xf32>
    %5 = vector.broadcast %4 : vector<1x128xf32> to vector<40x128xf32>
    %6 = arith.addf %3, %5 : vector<40x128xf32>
    %7 = vector.shape_cast %6 : vector<40x128xf32> to vector<5x8x128xf32>
    %c0_6 = arith.constant 0 : index
    %c0_7 = arith.constant 0 : index
    %8 = vector.load %arg4[%c0_6, %c0_7] : memref<32x128xf32, #tpu.memory_space<vmem>>, vector<32x128xf32>
    %9 = vector.extract_strided_slice %7 {offsets = [0, 0, 0], sizes = [1, 8, 128], strides = [1, 1, 1]} : vector<5x8x128xf32> to vector<1x8x128xf32>
    %10 = vector.shape_cast %9 : vector<1x8x128xf32> to vector<8x128xf32>
    %11 = math.tanh %10 : vector<8x128xf32>
    %12 = vector.extract_strided_slice %11 {offsets = [0, 0], sizes = [8, 32], strides = [1, 1]} : vector<8x128xf32> to vector<8x32xf32>
    %cst_8 = arith.constant 5.000000e-01 : f32
    %13 = vector.broadcast %cst_8 : f32 to vector<8x32xf32>
    %14 = arith.mulf %13, %12 : vector<8x32xf32>
    %cst_9 = arith.constant 5.000000e-01 : f32
    %15 = vector.broadcast %cst_9 : f32 to vector<8x32xf32>
    %16 = arith.addf %14, %15 : vector<8x32xf32>
    %17 = vector.extract_strided_slice %11 {offsets = [0, 64], sizes = [8, 32], strides = [1, 1]} : vector<8x128xf32> to vector<8x32xf32>
    %18 = vector.extract_strided_slice %11 {offsets = [0, 96], sizes = [8, 32], strides = [1, 1]} : vector<8x128xf32> to vector<8x32xf32>
    %cst_10 = arith.constant 5.000000e-01 : f32
    %19 = vector.broadcast %cst_10 : f32 to vector<8x32xf32>
    %20 = arith.mulf %19, %18 : vector<8x32xf32>
    %cst_11 = arith.constant 5.000000e-01 : f32
    %21 = vector.broadcast %cst_11 : f32 to vector<8x32xf32>
    %22 = arith.addf %20, %21 : vector<8x32xf32>
    %23 = arith.mulf %16, %17 : vector<8x32xf32>
    %24 = math.tanh %23 : vector<8x32xf32>
    %25 = arith.mulf %22, %24 : vector<8x32xf32>
    %26 = vector.extract_strided_slice %7 {offsets = [1, 0, 0], sizes = [1, 8, 128], strides = [1, 1, 1]} : vector<5x8x128xf32> to vector<1x8x128xf32>
    %27 = vector.shape_cast %26 : vector<1x8x128xf32> to vector<8x128xf32>
    %cst_12 = arith.constant dense<0.000000e+00> : vector<8x128xf32>
    %28 = tpu.matmul %25, %8, %cst_12 {dimension_numbers = #tpu.dot_dimension_numbers<[1], [0], [0], [1], [0, 0, 1, 1], [], []>} : vector<8x32xf32>, vector<32x128xf32>, vector<8x128xf32> -> vector<8x128xf32>
    %29 = arith.addf %27, %28 : vector<8x128xf32>
    %30 = math.tanh %29 : vector<8x128xf32>
    %31 = vector.extract_strided_slice %30 {offsets = [0, 0], sizes = [8, 32], strides = [1, 1]} : vector<8x128xf32> to vector<8x32xf32>
    %cst_13 = arith.constant 5.000000e-01 : f32
    %32 = vector.broadcast %cst_13 : f32 to vector<8x32xf32>
    %33 = arith.mulf %32, %31 : vector<8x32xf32>
    %cst_14 = arith.constant 5.000000e-01 : f32
    %34 = vector.broadcast %cst_14 : f32 to vector<8x32xf32>
    %35 = arith.addf %33, %34 : vector<8x32xf32>
    %36 = vector.extract_strided_slice %30 {offsets = [0, 32], sizes = [8, 32], strides = [1, 1]} : vector<8x128xf32> to vector<8x32xf32>
    %cst_15 = arith.constant 5.000000e-01 : f32
    %37 = vector.broadcast %cst_15 : f32 to vector<8x32xf32>
    %38 = arith.mulf %37, %36 : vector<8x32xf32>
    %cst_16 = arith.constant 5.000000e-01 : f32
    %39 = vector.broadcast %cst_16 : f32 to vector<8x32xf32>
    %40 = arith.addf %38, %39 : vector<8x32xf32>
    %41 = vector.extract_strided_slice %30 {offsets = [0, 64], sizes = [8, 32], strides = [1, 1]} : vector<8x128xf32> to vector<8x32xf32>
    %42 = vector.extract_strided_slice %30 {offsets = [0, 96], sizes = [8, 32], strides = [1, 1]} : vector<8x128xf32> to vector<8x32xf32>
    %cst_17 = arith.constant 5.000000e-01 : f32
    %43 = vector.broadcast %cst_17 : f32 to vector<8x32xf32>
    %44 = arith.mulf %43, %42 : vector<8x32xf32>
    %cst_18 = arith.constant 5.000000e-01 : f32
    %45 = vector.broadcast %cst_18 : f32 to vector<8x32xf32>
    %46 = arith.addf %44, %45 : vector<8x32xf32>
    %47 = arith.mulf %40, %23 : vector<8x32xf32>
    %48 = arith.mulf %35, %41 : vector<8x32xf32>
    %49 = arith.addf %47, %48 : vector<8x32xf32>
    %50 = math.tanh %49 : vector<8x32xf32>
    %51 = arith.mulf %46, %50 : vector<8x32xf32>
    %52 = vector.extract_strided_slice %7 {offsets = [2, 0, 0], sizes = [1, 8, 128], strides = [1, 1, 1]} : vector<5x8x128xf32> to vector<1x8x128xf32>
    %53 = vector.shape_cast %52 : vector<1x8x128xf32> to vector<8x128xf32>
    %cst_19 = arith.constant dense<0.000000e+00> : vector<8x128xf32>
    %54 = tpu.matmul %51, %8, %cst_19 {dimension_numbers = #tpu.dot_dimension_numbers<[1], [0], [0], [1], [0, 0, 1, 1], [], []>} : vector<8x32xf32>, vector<32x128xf32>, vector<8x128xf32> -> vector<8x128xf32>
    %55 = arith.addf %53, %54 : vector<8x128xf32>
    %56 = math.tanh %55 : vector<8x128xf32>
    %57 = vector.extract_strided_slice %56 {offsets = [0, 0], sizes = [8, 32], strides = [1, 1]} : vector<8x128xf32> to vector<8x32xf32>
    %cst_20 = arith.constant 5.000000e-01 : f32
    %58 = vector.broadcast %cst_20 : f32 to vector<8x32xf32>
    %59 = arith.mulf %58, %57 : vector<8x32xf32>
    %cst_21 = arith.constant 5.000000e-01 : f32
    %60 = vector.broadcast %cst_21 : f32 to vector<8x32xf32>
    %61 = arith.addf %59, %60 : vector<8x32xf32>
    %62 = vector.extract_strided_slice %56 {offsets = [0, 32], sizes = [8, 32], strides = [1, 1]} : vector<8x128xf32> to vector<8x32xf32>
    %cst_22 = arith.constant 5.000000e-01 : f32
    %63 = vector.broadcast %cst_22 : f32 to vector<8x32xf32>
    %64 = arith.mulf %63, %62 : vector<8x32xf32>
    %cst_23 = arith.constant 5.000000e-01 : f32
    %65 = vector.broadcast %cst_23 : f32 to vector<8x32xf32>
    %66 = arith.addf %64, %65 : vector<8x32xf32>
    %67 = vector.extract_strided_slice %56 {offsets = [0, 64], sizes = [8, 32], strides = [1, 1]} : vector<8x128xf32> to vector<8x32xf32>
    %68 = vector.extract_strided_slice %56 {offsets = [0, 96], sizes = [8, 32], strides = [1, 1]} : vector<8x128xf32> to vector<8x32xf32>
    %cst_24 = arith.constant 5.000000e-01 : f32
    %69 = vector.broadcast %cst_24 : f32 to vector<8x32xf32>
    %70 = arith.mulf %69, %68 : vector<8x32xf32>
    %cst_25 = arith.constant 5.000000e-01 : f32
    %71 = vector.broadcast %cst_25 : f32 to vector<8x32xf32>
    %72 = arith.addf %70, %71 : vector<8x32xf32>
    %73 = arith.mulf %66, %49 : vector<8x32xf32>
    %74 = arith.mulf %61, %67 : vector<8x32xf32>
    %75 = arith.addf %73, %74 : vector<8x32xf32>
    %76 = math.tanh %75 : vector<8x32xf32>
    %77 = arith.mulf %72, %76 : vector<8x32xf32>
    %78 = vector.extract_strided_slice %7 {offsets = [3, 0, 0], sizes = [1, 8, 128], strides = [1, 1, 1]} : vector<5x8x128xf32> to vector<1x8x128xf32>
    %79 = vector.shape_cast %78 : vector<1x8x128xf32> to vector<8x128xf32>
    %cst_26 = arith.constant dense<0.000000e+00> : vector<8x128xf32>
    %80 = tpu.matmul %77, %8, %cst_26 {dimension_numbers = #tpu.dot_dimension_numbers<[1], [0], [0], [1], [0, 0, 1, 1], [], []>} : vector<8x32xf32>, vector<32x128xf32>, vector<8x128xf32> -> vector<8x128xf32>
    %81 = arith.addf %79, %80 : vector<8x128xf32>
    %82 = math.tanh %81 : vector<8x128xf32>
    %83 = vector.extract_strided_slice %82 {offsets = [0, 0], sizes = [8, 32], strides = [1, 1]} : vector<8x128xf32> to vector<8x32xf32>
    %cst_27 = arith.constant 5.000000e-01 : f32
    %84 = vector.broadcast %cst_27 : f32 to vector<8x32xf32>
    %85 = arith.mulf %84, %83 : vector<8x32xf32>
    %cst_28 = arith.constant 5.000000e-01 : f32
    %86 = vector.broadcast %cst_28 : f32 to vector<8x32xf32>
    %87 = arith.addf %85, %86 : vector<8x32xf32>
    %88 = vector.extract_strided_slice %82 {offsets = [0, 32], sizes = [8, 32], strides = [1, 1]} : vector<8x128xf32> to vector<8x32xf32>
    %cst_29 = arith.constant 5.000000e-01 : f32
    %89 = vector.broadcast %cst_29 : f32 to vector<8x32xf32>
    %90 = arith.mulf %89, %88 : vector<8x32xf32>
    %cst_30 = arith.constant 5.000000e-01 : f32
    %91 = vector.broadcast %cst_30 : f32 to vector<8x32xf32>
    %92 = arith.addf %90, %91 : vector<8x32xf32>
    %93 = vector.extract_strided_slice %82 {offsets = [0, 64], sizes = [8, 32], strides = [1, 1]} : vector<8x128xf32> to vector<8x32xf32>
    %94 = vector.extract_strided_slice %82 {offsets = [0, 96], sizes = [8, 32], strides = [1, 1]} : vector<8x128xf32> to vector<8x32xf32>
    %cst_31 = arith.constant 5.000000e-01 : f32
    %95 = vector.broadcast %cst_31 : f32 to vector<8x32xf32>
    %96 = arith.mulf %95, %94 : vector<8x32xf32>
    %cst_32 = arith.constant 5.000000e-01 : f32
    %97 = vector.broadcast %cst_32 : f32 to vector<8x32xf32>
    %98 = arith.addf %96, %97 : vector<8x32xf32>
    %99 = arith.mulf %92, %75 : vector<8x32xf32>
    %100 = arith.mulf %87, %93 : vector<8x32xf32>
    %101 = arith.addf %99, %100 : vector<8x32xf32>
    %102 = math.tanh %101 : vector<8x32xf32>
    %103 = arith.mulf %98, %102 : vector<8x32xf32>
    %104 = vector.extract_strided_slice %7 {offsets = [4, 0, 0], sizes = [1, 8, 128], strides = [1, 1, 1]} : vector<5x8x128xf32> to vector<1x8x128xf32>
    %105 = vector.shape_cast %104 : vector<1x8x128xf32> to vector<8x128xf32>
    %cst_33 = arith.constant dense<0.000000e+00> : vector<8x128xf32>
    %106 = tpu.matmul %103, %8, %cst_33 {dimension_numbers = #tpu.dot_dimension_numbers<[1], [0], [0], [1], [0, 0, 1, 1], [], []>} : vector<8x32xf32>, vector<32x128xf32>, vector<8x128xf32> -> vector<8x128xf32>
    %107 = arith.addf %105, %106 : vector<8x128xf32>
    %108 = math.tanh %107 : vector<8x128xf32>
    %109 = vector.extract_strided_slice %108 {offsets = [0, 0], sizes = [8, 32], strides = [1, 1]} : vector<8x128xf32> to vector<8x32xf32>
    %cst_34 = arith.constant 5.000000e-01 : f32
    %110 = vector.broadcast %cst_34 : f32 to vector<8x32xf32>
    %111 = arith.mulf %110, %109 : vector<8x32xf32>
    %cst_35 = arith.constant 5.000000e-01 : f32
    %112 = vector.broadcast %cst_35 : f32 to vector<8x32xf32>
    %113 = arith.addf %111, %112 : vector<8x32xf32>
    %114 = vector.extract_strided_slice %108 {offsets = [0, 32], sizes = [8, 32], strides = [1, 1]} : vector<8x128xf32> to vector<8x32xf32>
    %cst_36 = arith.constant 5.000000e-01 : f32
    %115 = vector.broadcast %cst_36 : f32 to vector<8x32xf32>
    %116 = arith.mulf %115, %114 : vector<8x32xf32>
    %cst_37 = arith.constant 5.000000e-01 : f32
    %117 = vector.broadcast %cst_37 : f32 to vector<8x32xf32>
    %118 = arith.addf %116, %117 : vector<8x32xf32>
    %119 = vector.extract_strided_slice %108 {offsets = [0, 64], sizes = [8, 32], strides = [1, 1]} : vector<8x128xf32> to vector<8x32xf32>
    %120 = vector.extract_strided_slice %108 {offsets = [0, 96], sizes = [8, 32], strides = [1, 1]} : vector<8x128xf32> to vector<8x32xf32>
    %cst_38 = arith.constant 5.000000e-01 : f32
    %121 = vector.broadcast %cst_38 : f32 to vector<8x32xf32>
    %122 = arith.mulf %121, %120 : vector<8x32xf32>
    %cst_39 = arith.constant 5.000000e-01 : f32
    %123 = vector.broadcast %cst_39 : f32 to vector<8x32xf32>
    %124 = arith.addf %122, %123 : vector<8x32xf32>
    %125 = arith.mulf %118, %101 : vector<8x32xf32>
    %126 = arith.mulf %113, %119 : vector<8x32xf32>
    %127 = arith.addf %125, %126 : vector<8x32xf32>
    %128 = math.tanh %127 : vector<8x32xf32>
    %129 = arith.mulf %124, %128 : vector<8x32xf32>
    %c0_40 = arith.constant 0 : index
    %c0_41 = arith.constant 0 : index
    %130 = vector.load %arg2[%c0_40, %c0_41] : memref<8x6xf32, #tpu.memory_space<vmem>>, vector<8x6xf32>
    %c0_42 = arith.constant 0 : index
    %c0_43 = arith.constant 0 : index
    %131 = vector.load %arg6[%c0_42, %c0_43] : memref<6x64xf32, #tpu.memory_space<vmem>>, vector<6x64xf32>
    %cst_44 = arith.constant dense<0.000000e+00> : vector<8x64xf32>
    %132 = tpu.matmul %130, %131, %cst_44 {dimension_numbers = #tpu.dot_dimension_numbers<[1], [0], [0], [1], [0, 0, 1, 1], [], []>} : vector<8x6xf32>, vector<6x64xf32>, vector<8x64xf32> -> vector<8x64xf32>
    %c0_45 = arith.constant 0 : index
    %c0_46 = arith.constant 0 : index
    %133 = vector.load %arg7[%c0_45, %c0_46] : memref<32x64xf32, #tpu.memory_space<vmem>>, vector<32x64xf32>
    %cst_47 = arith.constant dense<0.000000e+00> : vector<8x64xf32>
    %134 = tpu.matmul %129, %133, %cst_47 {dimension_numbers = #tpu.dot_dimension_numbers<[1], [0], [0], [1], [0, 0, 1, 1], [], []>} : vector<8x32xf32>, vector<32x64xf32>, vector<8x64xf32> -> vector<8x64xf32>
    %135 = arith.addf %132, %134 : vector<8x64xf32>
    %c0_48 = arith.constant 0 : index
    %c0_49 = arith.constant 0 : index
    %136 = vector.load %arg8[%c0_48, %c0_49] : memref<1x64xf32, #tpu.memory_space<vmem>>, vector<1x64xf32>
    %137 = vector.broadcast %136 : vector<1x64xf32> to vector<8x64xf32>
    %138 = arith.addf %135, %137 : vector<8x64xf32>
    %cst_50 = arith.constant 0.000000e+00 : f32
    %139 = vector.broadcast %cst_50 : f32 to vector<8x64xf32>
    %140 = arith.maximumf %138, %139 : vector<8x64xf32>
    %c0_51 = arith.constant 0 : index
    %c0_52 = arith.constant 0 : index
    %141 = vector.load %arg9[%c0_51, %c0_52] : memref<64x32xf32, #tpu.memory_space<vmem>>, vector<64x32xf32>
    %cst_53 = arith.constant dense<0.000000e+00> : vector<8x32xf32>
    %142 = tpu.matmul %140, %141, %cst_53 {dimension_numbers = #tpu.dot_dimension_numbers<[1], [0], [0], [1], [0, 0, 1, 1], [], []>} : vector<8x64xf32>, vector<64x32xf32>, vector<8x32xf32> -> vector<8x32xf32>
    %c0_54 = arith.constant 0 : index
    %c0_55 = arith.constant 0 : index
    %143 = vector.load %arg10[%c0_54, %c0_55] : memref<1x32xf32, #tpu.memory_space<vmem>>, vector<1x32xf32>
    %144 = vector.broadcast %143 : vector<1x32xf32> to vector<8x32xf32>
    %145 = arith.addf %142, %144 : vector<8x32xf32>
    %cst_56 = arith.constant 0.000000e+00 : f32
    %146 = vector.broadcast %cst_56 : f32 to vector<8x32xf32>
    %147 = arith.maximumf %145, %146 : vector<8x32xf32>
    %c0_57 = arith.constant 0 : index
    %c0_58 = arith.constant 0 : index
    %148 = vector.load %arg11[%c0_57, %c0_58] : memref<32x1xf32, #tpu.memory_space<vmem>>, vector<32x1xf32>
    %cst_59 = arith.constant dense<0.000000e+00> : vector<8x1xf32>
    %149 = tpu.matmul %147, %148, %cst_59 {dimension_numbers = #tpu.dot_dimension_numbers<[1], [0], [0], [1], [0, 0, 1, 1], [], []>} : vector<8x32xf32>, vector<32x1xf32>, vector<8x1xf32> -> vector<8x1xf32>
    %c0_60 = arith.constant 0 : index
    %c0_61 = arith.constant 0 : index
    %150 = vector.load %arg12[%c0_60, %c0_61] : memref<1x1xf32, #tpu.memory_space<vmem>>, vector<1x1xf32>
    %151 = vector.broadcast %150 : vector<1x1xf32> to vector<8x1xf32>
    %152 = arith.addf %149, %151 : vector<8x1xf32>
    %c0_62 = arith.constant 0 : index
    %c0_63 = arith.constant 0 : index
    %153 = vector.load %arg13[%c0_62, %c0_63] : memref<8x1xf32, #tpu.memory_space<vmem>>, vector<8x1xf32>
    tpu.vector_store %arg13[%c0_62, %c0_63], %152 {strides = array<i32>} : memref<8x1xf32, #tpu.memory_space<vmem>>, vector<8x1xf32>,
    return
  }
  func.func @transform_0(%arg0: i32) -> (i32, i32, i32) {
    %c0_i32 = arith.constant 0 : i32
    %c0_i32_0 = arith.constant 0 : i32
    %c0_i32_1 = arith.constant 0 : i32
    return %c0_i32, %arg0, %c0_i32_0 : i32, i32, i32
  }
  func.func @transform_1(%arg0: i32) -> (i32, i32) {
    %c0_i32 = arith.constant 0 : i32
    %c0_i32_0 = arith.constant 0 : i32
    return %arg0, %c0_i32 : i32, i32
  }
  func.func @transform_2(%arg0: i32) -> (i32, i32) {
    %c0_i32 = arith.constant 0 : i32
    %c0_i32_0 = arith.constant 0 : i32
    %c0_i32_1 = arith.constant 0 : i32
    return %c0_i32, %c0_i32_0 : i32, i32
  }
  func.func @transform_3(%arg0: i32) -> (i32, i32) {
    %c0_i32 = arith.constant 0 : i32
    %c0_i32_0 = arith.constant 0 : i32
    %c0_i32_1 = arith.constant 0 : i32
    return %c0_i32, %c0_i32_0 : i32, i32
  }
  func.func @transform_4(%arg0: i32) -> (i32, i32) {
    %c0_i32 = arith.constant 0 : i32
    %c0_i32_0 = arith.constant 0 : i32
    %c0_i32_1 = arith.constant 0 : i32
    return %c0_i32, %c0_i32_0 : i32, i32
  }
  func.func @transform_5(%arg0: i32) -> (i32, i32) {
    %c0_i32 = arith.constant 0 : i32
    %c0_i32_0 = arith.constant 0 : i32
    %c0_i32_1 = arith.constant 0 : i32
    return %c0_i32, %c0_i32_0 : i32, i32
  }
  func.func @transform_6(%arg0: i32) -> (i32, i32) {
    %c0_i32 = arith.constant 0 : i32
    %c0_i32_0 = arith.constant 0 : i32
    %c0_i32_1 = arith.constant 0 : i32
    return %c0_i32, %c0_i32_0 : i32, i32
  }
  func.func @transform_7(%arg0: i32) -> (i32, i32) {
    %c0_i32 = arith.constant 0 : i32
    %c0_i32_0 = arith.constant 0 : i32
    %c0_i32_1 = arith.constant 0 : i32
    return %c0_i32, %c0_i32_0 : i32, i32
  }
  func.func @transform_8(%arg0: i32) -> (i32, i32) {
    %c0_i32 = arith.constant 0 : i32
    %c0_i32_0 = arith.constant 0 : i32
    %c0_i32_1 = arith.constant 0 : i32
    return %c0_i32, %c0_i32_0 : i32, i32
  }
  func.func @transform_9(%arg0: i32) -> (i32, i32) {
    %c0_i32 = arith.constant 0 : i32
    %c0_i32_0 = arith.constant 0 : i32
    %c0_i32_1 = arith.constant 0 : i32
    return %c0_i32, %c0_i32_0 : i32, i32
  }
  func.func @transform_10(%arg0: i32) -> (i32, i32) {
    %c0_i32 = arith.constant 0 : i32
    %c0_i32_0 = arith.constant 0 : i32
    %c0_i32_1 = arith.constant 0 : i32
    return %c0_i32, %c0_i32_0 : i32, i32
  }
  func.func @transform_11(%arg0: i32) -> (i32, i32) {
    %c0_i32 = arith.constant 0 : i32
    %c0_i32_0 = arith.constant 0 : i32
    %c0_i32_1 = arith.constant 0 : i32
    return %c0_i32, %c0_i32_0 : i32, i32
  }
  func.func @transform_12(%arg0: i32) -> (i32, i32) {
    %c0_i32 = arith.constant 0 : i32
    %c0_i32_0 = arith.constant 0 : i32
    return %arg0, %c0_i32 : i32, i32
  }
}

</mosaic_0001>

<llo_original>
// kernel: fwd.1
$region0: #{fwd.1}
  #allocation0 [shape = 'u32[]', space=smem, size = 0x4, offset = 0x4, fixed_abs, tag = 'smem constant byte address 0x4 - core index']
  #allocation1 [shape = 'u32[144,128]{1,0:T(1,128)}', space=vmem, size = 0x12000, scoped, tag = 'internal scratch']
  #allocation2 [shape = 'f32[1,1]{1,0:T(1,128)S(1)}', space=vmem, size = 0x200, scoped, tag = 'scoped memory for fwd.1']
  %s0 = inlined_call_operand.vmem [shape: f32[5,8,13], index: 0, kind: input, shape index: {}]
  %s1 = inlined_call_operand.vmem [shape: f32[8,6], index: 1, kind: input, shape index: {}]
  %s2 = inlined_call_operand.hbm [shape: f32[13,128], index: 2, kind: input, shape index: {}]
  %s3 = inlined_call_operand.hbm [shape: f32[32,128], index: 3, kind: input, shape index: {}]
  %s4 = inlined_call_operand.vmem [shape: f32[1,128], index: 4, kind: input, shape index: {}]
  %s5 = inlined_call_operand.vmem [shape: f32[6,64], index: 5, kind: input, shape index: {}]
  %s6 = inlined_call_operand.hbm [shape: f32[32,64], index: 6, kind: input, shape index: {}]
  %s7 = inlined_call_operand.vmem [shape: f32[1,64], index: 7, kind: input, shape index: {}]
  %s8 = inlined_call_operand.vmem [shape: f32[64,32], index: 8, kind: input, shape index: {}]
  %s9 = inlined_call_operand.vmem [shape: f32[1,32], index: 9, kind: input, shape index: {}]
  %s10 = inlined_call_operand.hbm [shape: f32[32,1], index: 10, kind: input, shape index: {}]
  %s11 = inlined_call_operand.<no memory space> [shape: f32[1,1], index: 11, kind: input, shape index: {}]
  %s12 = inlined_call_operand.vmem [shape: f32[8,1], index: 12, kind: output, shape index: {}]
  %s13 = sld [smem:[#allocation0]]
  $region74: #{fwd.1} parent=0
    _
  %s15 = ssub.s32 1, %s13
  %s16 = scalar_select 0, %s15, %s13
  %v17 = vstv %s11
  %18 = vst [vmem:[#allocation2] sm:$0x1] %v17
  $region1: #{fwd.1} parent=0
    #allocation3 [shape = 'u8[8192]{0}', space=vmem, size = 0x2000, scoped, tag = 'input window, operand 2, single buffered']
    #allocation4 [shape = 's32[1]{0}', space=sflag, size = 0x4, scoped, tag = 'scoped memory for fwd.1']
    #allocation5 [shape = 'u8[16384]{0}', space=vmem, size = 0x4000, scoped, tag = 'input window, operand 3, single buffered']
    #allocation6 [shape = 's32[1]{0}', space=sflag, size = 0x4, scoped, tag = 'scoped memory for fwd.1']
    #allocation7 [shape = 'u8[16384]{0}', space=vmem, size = 0x4000, scoped, tag = 'input window, operand 6, single buffered']
    #allocation8 [shape = 'u8[16384]{0}', space=vmem, size = 0x4000, scoped, tag = 'input window, operand 10, single buffered']
    #allocation9 [shape = 's32[1]{0}', space=sflag, size = 0x4, scoped, tag = 'scoped memory for fwd.1']
    %19 = vsyncpa [#allocation4], 0
    %20 = vsyncpa [#allocation6], 0
    %21 = vsyncpa [#allocation9], 0
    // Predicated region
    $region2: #{fwd.1} parent=1 // pred_check
      _
    $region3: #{fwd.1} parent=1 // pred_check_branch
      %23 = sbr.rel (0) target = $region5
    $region4: #{fwd.1} parent=1 // pred_region
      _
    $region5: #{fwd.1} parent=1 // pred_fallthru
      _
    // Predicated region
    $region6: #{fwd.1} parent=1 // pred_check
      _
    $region7: #{fwd.1} parent=1 // pred_check_branch
      %25 = sbr.rel (0) target = $region9
    $region8: #{fwd.1} parent=1 // pred_region
      _
    $region9: #{fwd.1} parent=1 // pred_fallthru
      _
    // Predicated region
    $region10: #{fwd.1} parent=1 // pred_check
      _
    $region11: #{fwd.1} parent=1 // pred_check_branch
      %27 = sbr.rel (0) target = $region13
    $region12: #{fwd.1} parent=1 // pred_region
      %s29 = ssub.s32 256, 256
      %30 = vsyncadd [#allocation4], %s29
      %s31 = sshll.u32 [#allocation3], 4
      %s32 = int_to_ptr.vmem [resolvable:$true] %s31
      %37 = dma.hbm_to_vmem [thread:$0]  %s2, 256, %s32, [#allocation4], 128, 128, 8
    $region13: #{fwd.1} parent=1 // pred_fallthru
      _
    // Predicated region
    $region14: #{fwd.1} parent=1 // pred_check
      _
    $region15: #{fwd.1} parent=1 // pred_check_branch
      %39 = sbr.rel (0) target = $region17
    $region16: #{fwd.1} parent=1 // pred_region
      %s41 = ssub.s32 512, 512
      %42 = vsyncadd [#allocation6], %s41
      %s43 = sshll.u32 [#allocation5], 4
      %s44 = int_to_ptr.vmem [resolvable:$true] %s43
      %49 = dma.hbm_to_vmem [thread:$0]  %s3, 512, %s44, [#allocation6], 128, 128, 8
    $region17: #{fwd.1} parent=1 // pred_fallthru
      _
    // Predicated region
    $region18: #{fwd.1} parent=1 // pred_check
      _
    $region19: #{fwd.1} parent=1 // pred_check_branch
      %51 = sbr.rel (0) target = $region21
    $region20: #{fwd.1} parent=1 // pred_region
      _
    $region21: #{fwd.1} parent=1 // pred_fallthru
      _
    // Predicated region
    $region22: #{fwd.1} parent=1 // pred_check
      _
    $region23: #{fwd.1} parent=1 // pred_check_branch
      %53 = sbr.rel (0) target = $region25
    $region24: #{fwd.1} parent=1 // pred_region
      _
    $region25: #{fwd.1} parent=1 // pred_fallthru
      _
    // Predicated region
    $region26: #{fwd.1} parent=1 // pred_check
      _
    $region27: #{fwd.1} parent=1 // pred_check_branch
      %55 = sbr.rel (0) target = $region29
    $region28: #{fwd.1} parent=1 // pred_region
      %s57 = ssub.s32 512, 512
      %58 = vsyncadd [#allocation6], %s57
      %s59 = sshll.u32 [#allocation7], 4
      %s60 = int_to_ptr.vmem [resolvable:$true] %s59
      %65 = dma.hbm_to_vmem [thread:$0]  %s6, 512, %s60, [#allocation6], 128, 128, 8
    $region29: #{fwd.1} parent=1 // pred_fallthru
      _
    // Predicated region
    $region30: #{fwd.1} parent=1 // pred_check
      _
    $region31: #{fwd.1} parent=1 // pred_check_branch
      %67 = sbr.rel (0) target = $region33
    $region32: #{fwd.1} parent=1 // pred_region
      _
    $region33: #{fwd.1} parent=1 // pred_fallthru
      _
    // Predicated region
    $region34: #{fwd.1} parent=1 // pred_check
      _
    $region35: #{fwd.1} parent=1 // pred_check_branch
      %69 = sbr.rel (0) target = $region37
    $region36: #{fwd.1} parent=1 // pred_region
      _
    $region37: #{fwd.1} parent=1 // pred_fallthru
      _
    // Predicated region
    $region38: #{fwd.1} parent=1 // pred_check
      _
    $region39: #{fwd.1} parent=1 // pred_check_branch
      %71 = sbr.rel (0) target = $region41
    $region40: #{fwd.1} parent=1 // pred_region
      _
    $region41: #{fwd.1} parent=1 // pred_fallthru
      _
    // Predicated region
    $region42: #{fwd.1} parent=1 // pred_check
      _
    $region43: #{fwd.1} parent=1 // pred_check_branch
      %73 = sbr.rel (0) target = $region45
    $region44: #{fwd.1} parent=1 // pred_region
      %s75 = ssub.s32 512, 512
      %76 = vsyncadd [#allocation9], %s75
      %s77 = sshll.u32 [#allocation8], 4
      %s78 = int_to_ptr.vmem [resolvable:$true] %s77
      %83 = dma.hbm_to_vmem [thread:$0]  %s10, 512, %s78, [#allocation9], 128, 128, 8
    $region45: #{fwd.1} parent=1 // pred_fallthru
      _
    // Predicated region
    $region46: #{fwd.1} parent=1 // pred_check
      _
    $region47: #{fwd.1} parent=1 // pred_check_branch
      %85 = sbr.rel (0) target = $region49
    $region48: #{fwd.1} parent=1 // pred_region
      _
    $region49: #{fwd.1} parent=1 // pred_fallthru
      _
    // Predicated region
    $region50: #{fwd.1} parent=1 // pred_check
      _
    $region51: #{fwd.1} parent=1 // pred_check_branch
      %87 = sbr.rel (0) target = $region53
    $region52: #{fwd.1} parent=1 // pred_region
      %88 = dma.done [#allocation4], 256
    $region53: #{fwd.1} parent=1 // pred_fallthru
      _
    // Predicated region
    $region54: #{fwd.1} parent=1 // pred_check
      _
    $region55: #{fwd.1} parent=1 // pred_check_branch
      %90 = sbr.rel (0) target = $region57
    $region56: #{fwd.1} parent=1 // pred_region
      %91 = dma.done [#allocation6], 512
    $region57: #{fwd.1} parent=1 // pred_fallthru
      _
    // Predicated region
    $region58: #{fwd.1} parent=1 // pred_check
      _
    $region59: #{fwd.1} parent=1 // pred_check_branch
      %93 = sbr.rel (0) target = $region61
    $region60: #{fwd.1} parent=1 // pred_region
      %94 = dma.done [#allocation6], 512
    $region61: #{fwd.1} parent=1 // pred_fallthru
      _
    // Predicated region
    $region62: #{fwd.1} parent=1 // pred_check
      _
    $region63: #{fwd.1} parent=1 // pred_check_branch
      %96 = sbr.rel (0) target = $region65
    $region64: #{fwd.1} parent=1 // pred_region
      %97 = dma.done [#allocation9], 512
    $region65: #{fwd.1} parent=1 // pred_fallthru
      _
    %v98 = vld [vmem:[%s0] sm:$0xff]
    %v99 = vld [vmem:[%s0 + $0x8] sm:$0xff]
    %v100 = vld [vmem:[%s0 + $0x10] sm:$0xff]
    %v101 = vld [vmem:[%s0 + $0x18] sm:$0xff]
    %v102 = vld [vmem:[%s0 + $0x20] sm:$0xff]
    %v103 = vld [vmem:[#allocation3] sm:$0xff]
    %v104 = vld [vmem:[#allocation3 + $0x8] sm:$0x1f]
    %v105 = vld [vmem:[%s4] sm:$0x1]
    %v107 = vlaneseq
    %v108 = vshrl.u32 %v107, 7
    %v109 = vsub.s32 0, %v108
    %v110 = vrot.slane %v105, %v109
    %vm112 = vcmask 105472
    %v114 = vsel %vm112, %v98, 0
    %v117 = vsel %vm112, %v99, 0
    %v120 = vsel %vm112, %v100, 0
    %v123 = vsel %vm112, %v101, 0
    %v126 = vsel %vm112, %v102, 0
    %vm128 = vcmask 1044480
    %v130 = vsel %vm128, %v104, 0
    %132 = vmatprep.subr.mxu0 0.0
    %133 = vmatpush1.msra.mxu0 0.0
    %134 = vmatprep.subr.mxu0 0.0
    %135 = vmatpush1.msra.mxu0 0.0
    %136 = vmatprep.subr.mxu0 0.0
    %137 = vmatpush1.msra.mxu0 0.0
    %138 = vmatprep.subr.mxu0 0.0
    %139 = vmatpush1.msra.mxu0 0.0
    %140 = vmatprep.subr.mxu0 0.0
    %141 = vmatpush1.msra.mxu0 0.0
    %142 = vmatprep.subr.mxu0 0.0
    %143 = vmatpush1.msra.mxu0 0.0
    %144 = vmatprep.subr.mxu0 0.0
    %145 = vmatpush1.msra.mxu0 0.0
    %146 = vmatprep.subr.mxu0 0.0
    %147 = vmatpush1.msra.mxu0 0.0
    %148 = vmatprep.subr.mxu0 0.0
    %149 = vmatpush1.msra.mxu0 0.0
    %150 = vmatprep.subr.mxu0 0.0
    %151 = vmatpush1.msra.mxu0 0.0
    %152 = vmatprep.subr.mxu0 0.0
    %153 = vmatpush1.msra.mxu0 0.0
    %154 = vmatprep.subr.mxu0 0.0
    %155 = vmatpush1.msra.mxu0 0.0
    %156 = vmatprep.subr.mxu0 0.0
    %157 = vmatpush1.msra.mxu0 0.0
    %158 = vmatprep.subr.mxu0 0.0
    %159 = vmatpush1.msra.mxu0 0.0
    %160 = vmatprep.subr.mxu0 0.0
    %161 = vmatpush1.msra.mxu0 %v130
    %162 = vmatprep.subr.mxu0 0.0
    %163 = vmatpush1.msra.mxu0 %v103
    %164 = vmatprep.subr.mxu0 0.0
    %165 = vmatpush2.msra.mxu0 0.0
    %166 = vmatprep.subr.mxu0 0.0
    %167 = vmatpush2.msra.mxu0 0.0
    %168 = vmatprep.subr.mxu0 0.0
    %169 = vmatpush2.msra.mxu0 0.0
    %170 = vmatprep.subr.mxu0 0.0
    %171 = vmatpush2.msra.mxu0 0.0
    %172 = vmatprep.subr.mxu0 0.0
    %173 = vmatpush2.msra.mxu0 0.0
    %174 = vmatprep.subr.mxu0 0.0
    %175 = vmatpush2.msra.mxu0 0.0
    %176 = vmatprep.subr.mxu0 0.0
    %177 = vmatpush2.msra.mxu0 0.0
    %178 = vmatprep.subr.mxu0 0.0
    %179 = vmatpush2.msra.mxu0 0.0
    %180 = vmatprep.subr.mxu0 0.0
    %181 = vmatpush2.msra.mxu0 0.0
    %182 = vmatprep.subr.mxu0 0.0
    %183 = vmatpush2.msra.mxu0 0.0
    %184 = vmatprep.subr.mxu0 0.0
    %185 = vmatpush2.msra.mxu0 0.0
    %186 = vmatprep.subr.mxu0 0.0
    %187 = vmatpush2.msra.mxu0 0.0
    %188 = vmatprep.subr.mxu0 0.0
    %189 = vmatpush2.msra.mxu0 0.0
    %190 = vmatprep.subr.mxu0 0.0
    %191 = vmatpush2.msra.mxu0 0.0
    %192 = vmatprep.subr.mxu0 0.0
    %193 = vmatpush2.msra.mxu0 0.0
    %194 = vmatprep.subr.mxu0 0.0
    %195 = vmatpush2.msra.mxu0 0.0
    %196 = vmatprep.mubr.f32.mxu0 0.0
    %197 = vmatmul.mubr.f32.gmra.mxu0 %v114
    %v198 = vpop.f32.mrf.mxu0
    %v199 = vadd.f32 %v110, %v198
    %v200 = vpop.f32.mrf.mxu0
    %201 = vmatprep.mubr.f32.mxu0 0.0
    %202 = vmatmul.mubr.f32.gmra.mxu0 %v117
    %v203 = vpop.f32.mrf.mxu0
    %v204 = vadd.f32 %v110, %v203
    %v205 = vpop.f32.mrf.mxu0
    %206 = vmatprep.mubr.f32.mxu0 0.0
    %207 = vmatmul.mubr.f32.gmra.mxu0 %v120
    %v208 = vpop.f32.mrf.mxu0
    %v209 = vadd.f32 %v110, %v208
    %v210 = vpop.f32.mrf.mxu0
    %211 = vmatprep.mubr.f32.mxu0 0.0
    %212 = vmatmul.mubr.f32.gmra.mxu0 %v123
    %v213 = vpop.f32.mrf.mxu0
    %v214 = vadd.f32 %v110, %v213
    %v215 = vpop.f32.mrf.mxu0
    %216 = vmatprep.mubr.f32.mxu0 0.0
    %217 = vmatmul.mubr.f32.gmra.mxu0 %v126
    %v218 = vpop.f32.mrf.mxu0
    %v219 = vadd.f32 %v110, %v218
    %v220 = vpop.f32.mrf.mxu0
    %221 = vdwg.mxu0
    %v222 = vld [vmem:[#allocation5] sm:$0xff]
    %v223 = vld [vmem:[#allocation5 + $0x8] sm:$0xff]
    %v224 = vld [vmem:[#allocation5 + $0x10] sm:$0xff]
    %v225 = vld [vmem:[#allocation5 + $0x18] sm:$0xff]
    %v226 = vtanh.pop %v199
    %v227 = vmul.f32 %v226, 0.5
    %v228 = vadd.f32 %v227, 0.5
    %230 = vrot.lane.b32.xlu0 %v226, 64
    %v231 = vpop.permute.xlu0 %230
    %v233 = vmul.f32 %v228, %v231
    %v234 = vtanh.pop %v233
    %236 = vrot.lane.b32.xlu0 %v234, 96
    %v237 = vpop.permute.xlu0 %236
    %v239 = vmul.f32 %v228, %v237
    %241 = vrot.lane.b32.xlu0 %v239, 32
    %v242 = vpop.permute.xlu0 %241
    %vm243 = vcmask 261120
    %v244 = vsel %vm243, %v242, 0
    %246 = vmatprep.subr.mxu0 0.0
    %247 = vmatpush1.msra.mxu0 0.0
    %248 = vmatprep.subr.mxu0 0.0
    %249 = vmatpush1.msra.mxu0 0.0
    %250 = vmatprep.subr.mxu0 0.0
    %251 = vmatpush1.msra.mxu0 0.0
    %252 = vmatprep.subr.mxu0 0.0
    %253 = vmatpush1.msra.mxu0 0.0
    %254 = vmatprep.subr.mxu0 0.0
    %255 = vmatpush1.msra.mxu0 0.0
    %256 = vmatprep.subr.mxu0 0.0
    %257 = vmatpush1.msra.mxu0 0.0
    %258 = vmatprep.subr.mxu0 0.0
    %259 = vmatpush1.msra.mxu0 0.0
    %260 = vmatprep.subr.mxu0 0.0
    %261 = vmatpush1.msra.mxu0 0.0
    %262 = vmatprep.subr.mxu0 0.0
    %263 = vmatpush1.msra.mxu0 0.0
    %264 = vmatprep.subr.mxu0 0.0
    %265 = vmatpush1.msra.mxu0 0.0
    %266 = vmatprep.subr.mxu0 0.0
    %267 = vmatpush1.msra.mxu0 0.0
    %268 = vmatprep.subr.mxu0 0.0
    %269 = vmatpush1.msra.mxu0 0.0
    %270 = vmatprep.subr.mxu0 0.0
    %271 = vmatpush1.msra.mxu0 %v225
    %272 = vmatprep.subr.mxu0 0.0
    %273 = vmatpush1.msra.mxu0 %v224
    %274 = vmatprep.subr.mxu0 0.0
    %275 = vmatpush1.msra.mxu0 %v223
    %276 = vmatprep.subr.mxu0 0.0
    %277 = vmatpush1.msra.mxu0 %v222
    %278 = vmatprep.subr.mxu0 0.0
    %279 = vmatpush2.msra.mxu0 0.0
    %280 = vmatprep.subr.mxu0 0.0
    %281 = vmatpush2.msra.mxu0 0.0
    %282 = vmatprep.subr.mxu0 0.0
    %283 = vmatpush2.msra.mxu0 0.0
    %284 = vmatprep.subr.mxu0 0.0
    %285 = vmatpush2.msra.mxu0 0.0
    %286 = vmatprep.subr.mxu0 0.0
    %287 = vmatpush2.msra.mxu0 0.0
    %288 = vmatprep.subr.mxu0 0.0
    %289 = vmatpush2.msra.mxu0 0.0
    %290 = vmatprep.subr.mxu0 0.0
    %291 = vmatpush2.msra.mxu0 0.0
    %292 = vmatprep.subr.mxu0 0.0
    %293 = vmatpush2.msra.mxu0 0.0
    %294 = vmatprep.subr.mxu0 0.0
    %295 = vmatpush2.msra.mxu0 0.0
    %296 = vmatprep.subr.mxu0 0.0
    %297 = vmatpush2.msra.mxu0 0.0
    %298 = vmatprep.subr.mxu0 0.0
    %299 = vmatpush2.msra.mxu0 0.0
    %300 = vmatprep.subr.mxu0 0.0
    %301 = vmatpush2.msra.mxu0 0.0
    %302 = vmatprep.subr.mxu0 0.0
    %303 = vmatpush2.msra.mxu0 0.0
    %304 = vmatprep.subr.mxu0 0.0
    %305 = vmatpush2.msra.mxu0 0.0
    %306 = vmatprep.subr.mxu0 0.0
    %307 = vmatpush2.msra.mxu0 0.0
    %308 = vmatprep.subr.mxu0 0.0
    %309 = vmatpush2.msra.mxu0 0.0
    %310 = vmatprep.mubr.f32.mxu0 0.0
    %311 = vmatmul.mubr.f32.gmra.mxu0 %v244
    %v312 = vpop.f32.mrf.mxu0
    %v313 = vadd.f32 0.0, %v312
    %v314 = vpop.f32.mrf.mxu0
    %315 = vdwg.mxu0
    %v316 = vadd.f32 %v204, %v313
    %v317 = vtanh.pop %v316
    %v318 = vmul.f32 %v317, 0.5
    %v319 = vadd.f32 %v318, 0.5
    %321 = vrot.lane.b32.xlu0 %v233, 32
    %v322 = vpop.permute.xlu0 %321
    %v324 = vmul.f32 %v319, %v322
    %326 = vrot.lane.b32.xlu0 %v317, 64
    %v327 = vpop.permute.xlu0 %326
    %v329 = vmul.f32 %v319, %v327
    %331 = vrot.lane.b32.xlu0 %v329, 32
    %v332 = vpop.permute.xlu0 %331
    %v334 = vadd.f32 %v324, %v332
    %v335 = vtanh.pop %v334
    %337 = vrot.lane.b32.xlu0 %v335, 64
    %v338 = vpop.permute.xlu0 %337
    %v340 = vmul.f32 %v319, %v338
    %342 = vrot.lane.b32.xlu0 %v340, 32
    %v343 = vpop.permute.xlu0 %342
    %v344 = vsel %vm243, %v343, 0
    %346 = vmatprep.subr.mxu0 0.0
    %347 = vmatpush1.msra.mxu0 0.0
    %348 = vmatprep.subr.mxu0 0.0
    %349 = vmatpush1.msra.mxu0 0.0
    %350 = vmatprep.subr.mxu0 0.0
    %351 = vmatpush1.msra.mxu0 0.0
    %352 = vmatprep.subr.mxu0 0.0
    %353 = vmatpush1.msra.mxu0 0.0
    %354 = vmatprep.subr.mxu0 0.0
    %355 = vmatpush1.msra.mxu0 0.0
    %356 = vmatprep.subr.mxu0 0.0
    %357 = vmatpush1.msra.mxu0 0.0
    %358 = vmatprep.subr.mxu0 0.0
    %359 = vmatpush1.msra.mxu0 0.0
    %360 = vmatprep.subr.mxu0 0.0
    %361 = vmatpush1.msra.mxu0 0.0
    %362 = vmatprep.subr.mxu0 0.0
    %363 = vmatpush1.msra.mxu0 0.0
    %364 = vmatprep.subr.mxu0 0.0
    %365 = vmatpush1.msra.mxu0 0.0
    %366 = vmatprep.subr.mxu0 0.0
    %367 = vmatpush1.msra.mxu0 0.0
    %368 = vmatprep.subr.mxu0 0.0
    %369 = vmatpush1.msra.mxu0 0.0
    %370 = vmatprep.subr.mxu0 0.0
    %371 = vmatpush1.msra.mxu0 %v225
    %372 = vmatprep.subr.mxu0 0.0
    %373 = vmatpush1.msra.mxu0 %v224
    %374 = vmatprep.subr.mxu0 0.0
    %375 = vmatpush1.msra.mxu0 %v223
    %376 = vmatprep.subr.mxu0 0.0
    %377 = vmatpush1.msra.mxu0 %v222
    %378 = vmatprep.subr.mxu0 0.0
    %379 = vmatpush2.msra.mxu0 0.0
    %380 = vmatprep.subr.mxu0 0.0
    %381 = vmatpush2.msra.mxu0 0.0
    %382 = vmatprep.subr.mxu0 0.0
    %383 = vmatpush2.msra.mxu0 0.0
    %384 = vmatprep.subr.mxu0 0.0
    %385 = vmatpush2.msra.mxu0 0.0
    %386 = vmatprep.subr.mxu0 0.0
    %387 = vmatpush2.msra.mxu0 0.0
    %388 = vmatprep.subr.mxu0 0.0
    %389 = vmatpush2.msra.mxu0 0.0
    %390 = vmatprep.subr.mxu0 0.0
    %391 = vmatpush2.msra.mxu0 0.0
    %392 = vmatprep.subr.mxu0 0.0
    %393 = vmatpush2.msra.mxu0 0.0
    %394 = vmatprep.subr.mxu0 0.0
    %395 = vmatpush2.msra.mxu0 0.0
    %396 = vmatprep.subr.mxu0 0.0
    %397 = vmatpush2.msra.mxu0 0.0
    %398 = vmatprep.subr.mxu0 0.0
    %399 = vmatpush2.msra.mxu0 0.0
    %400 = vmatprep.subr.mxu0 0.0
    %401 = vmatpush2.msra.mxu0 0.0
    %402 = vmatprep.subr.mxu0 0.0
    %403 = vmatpush2.msra.mxu0 0.0
    %404 = vmatprep.subr.mxu0 0.0
    %405 = vmatpush2.msra.mxu0 0.0
    %406 = vmatprep.subr.mxu0 0.0
    %407 = vmatpush2.msra.mxu0 0.0
    %408 = vmatprep.subr.mxu0 0.0
    %409 = vmatpush2.msra.mxu0 0.0
    %410 = vmatprep.mubr.f32.mxu0 0.0
    %411 = vmatmul.mubr.f32.gmra.mxu0 %v344
    %v412 = vpop.f32.mrf.mxu0
    %v413 = vadd.f32 0.0, %v412
    %v414 = vpop.f32.mrf.mxu0
    %415 = vdwg.mxu0
    %v416 = vadd.f32 %v209, %v413
    %v417 = vtanh.pop %v416
    %v418 = vmul.f32 %v417, 0.5
    %v419 = vadd.f32 %v418, 0.5
    %v420 = vmul.f32 %v419, %v334
    %422 = vrot.lane.b32.xlu0 %v417, 64
    %v423 = vpop.permute.xlu0 %422
    %v425 = vmul.f32 %v419, %v423
    %427 = vrot.lane.b32.xlu0 %v425, 32
    %v428 = vpop.permute.xlu0 %427
    %v430 = vadd.f32 %v420, %v428
    %v431 = vtanh.pop %v430
    %433 = vrot.lane.b32.xlu0 %v431, 64
    %v434 = vpop.permute.xlu0 %433
    %v436 = vmul.f32 %v419, %v434
    %438 = vrot.lane.b32.xlu0 %v436, 32
    %v439 = vpop.permute.xlu0 %438
    %v440 = vsel %vm243, %v439, 0
    %442 = vmatprep.subr.mxu0 0.0
    %443 = vmatpush1.msra.mxu0 0.0
    %444 = vmatprep.subr.mxu0 0.0
    %445 = vmatpush1.msra.mxu0 0.0
    %446 = vmatprep.subr.mxu0 0.0
    %447 = vmatpush1.msra.mxu0 0.0
    %448 = vmatprep.subr.mxu0 0.0
    %449 = vmatpush1.msra.mxu0 0.0
    %450 = vmatprep.subr.mxu0 0.0
    %451 = vmatpush1.msra.mxu0 0.0
    %452 = vmatprep.subr.mxu0 0.0
    %453 = vmatpush1.msra.mxu0 0.0
    %454 = vmatprep.subr.mxu0 0.0
    %455 = vmatpush1.msra.mxu0 0.0
    %456 = vmatprep.subr.mxu0 0.0
    %457 = vmatpush1.msra.mxu0 0.0
    %458 = vmatprep.subr.mxu0 0.0
    %459 = vmatpush1.msra.mxu0 0.0
    %460 = vmatprep.subr.mxu0 0.0
    %461 = vmatpush1.msra.mxu0 0.0
    %462 = vmatprep.subr.mxu0 0.0
    %463 = vmatpush1.msra.mxu0 0.0
    %464 = vmatprep.subr.mxu0 0.0
    %465 = vmatpush1.msra.mxu0 0.0
    %466 = vmatprep.subr.mxu0 0.0
    %467 = vmatpush1.msra.mxu0 %v225
    %468 = vmatprep.subr.mxu0 0.0
    %469 = vmatpush1.msra.mxu0 %v224
    %470 = vmatprep.subr.mxu0 0.0
    %471 = vmatpush1.msra.mxu0 %v223
    %472 = vmatprep.subr.mxu0 0.0
    %473 = vmatpush1.msra.mxu0 %v222
    %474 = vmatprep.subr.mxu0 0.0
    %475 = vmatpush2.msra.mxu0 0.0
    %476 = vmatprep.subr.mxu0 0.0
    %477 = vmatpush2.msra.mxu0 0.0
    %478 = vmatprep.subr.mxu0 0.0
    %479 = vmatpush2.msra.mxu0 0.0
    %480 = vmatprep.subr.mxu0 0.0
    %481 = vmatpush2.msra.mxu0 0.0
    %482 = vmatprep.subr.mxu0 0.0
    %483 = vmatpush2.msra.mxu0 0.0
    %484 = vmatprep.subr.mxu0 0.0
    %485 = vmatpush2.msra.mxu0 0.0
    %486 = vmatprep.subr.mxu0 0.0
    %487 = vmatpush2.msra.mxu0 0.0
    %488 = vmatprep.subr.mxu0 0.0
    %489 = vmatpush2.msra.mxu0 0.0
    %490 = vmatprep.subr.mxu0 0.0
    %491 = vmatpush2.msra.mxu0 0.0
    %492 = vmatprep.subr.mxu0 0.0
    %493 = vmatpush2.msra.mxu0 0.0
    %494 = vmatprep.subr.mxu0 0.0
    %495 = vmatpush2.msra.mxu0 0.0
    %496 = vmatprep.subr.mxu0 0.0
    %497 = vmatpush2.msra.mxu0 0.0
    %498 = vmatprep.subr.mxu0 0.0
    %499 = vmatpush2.msra.mxu0 0.0
    %500 = vmatprep.subr.mxu0 0.0
    %501 = vmatpush2.msra.mxu0 0.0
    %502 = vmatprep.subr.mxu0 0.0
    %503 = vmatpush2.msra.mxu0 0.0
    %504 = vmatprep.subr.mxu0 0.0
    %505 = vmatpush2.msra.mxu0 0.0
    %506 = vmatprep.mubr.f32.mxu0 0.0
    %507 = vmatmul.mubr.f32.gmra.mxu0 %v440
    %v508 = vpop.f32.mrf.mxu0
    %v509 = vadd.f32 0.0, %v508
    %v510 = vpop.f32.mrf.mxu0
    %511 = vdwg.mxu0
    %v512 = vadd.f32 %v214, %v509
    %v513 = vtanh.pop %v512
    %v514 = vmul.f32 %v513, 0.5
    %v515 = vadd.f32 %v514, 0.5
    %v516 = vmul.f32 %v515, %v430
    %518 = vrot.lane.b32.xlu0 %v513, 64
    %v519 = vpop.permute.xlu0 %518
    %v521 = vmul.f32 %v515, %v519
    %523 = vrot.lane.b32.xlu0 %v521, 32
    %v524 = vpop.permute.xlu0 %523
    %v526 = vadd.f32 %v516, %v524
    %v527 = vtanh.pop %v526
    %529 = vrot.lane.b32.xlu0 %v527, 64
    %v530 = vpop.permute.xlu0 %529
    %v532 = vmul.f32 %v515, %v530
    %534 = vrot.lane.b32.xlu0 %v532, 32
    %v535 = vpop.permute.xlu0 %534
    %v536 = vsel %vm243, %v535, 0
    %538 = vmatprep.subr.mxu0 0.0
    %539 = vmatpush1.msra.mxu0 0.0
    %540 = vmatprep.subr.mxu0 0.0
    %541 = vmatpush1.msra.mxu0 0.0
    %542 = vmatprep.subr.mxu0 0.0
    %543 = vmatpush1.msra.mxu0 0.0
    %544 = vmatprep.subr.mxu0 0.0
    %545 = vmatpush1.msra.mxu0 0.0
    %546 = vmatprep.subr.mxu0 0.0
    %547 = vmatpush1.msra.mxu0 0.0
    %548 = vmatprep.subr.mxu0 0.0
    %549 = vmatpush1.msra.mxu0 0.0
    %550 = vmatprep.subr.mxu0 0.0
    %551 = vmatpush1.msra.mxu0 0.0
    %552 = vmatprep.subr.mxu0 0.0
    %553 = vmatpush1.msra.mxu0 0.0
    %554 = vmatprep.subr.mxu0 0.0
    %555 = vmatpush1.msra.mxu0 0.0
    %556 = vmatprep.subr.mxu0 0.0
    %557 = vmatpush1.msra.mxu0 0.0
    %558 = vmatprep.subr.mxu0 0.0
    %559 = vmatpush1.msra.mxu0 0.0
    %560 = vmatprep.subr.mxu0 0.0
    %561 = vmatpush1.msra.mxu0 0.0
    %562 = vmatprep.subr.mxu0 0.0
    %563 = vmatpush1.msra.mxu0 %v225
    %564 = vmatprep.subr.mxu0 0.0
    %565 = vmatpush1.msra.mxu0 %v224
    %566 = vmatprep.subr.mxu0 0.0
    %567 = vmatpush1.msra.mxu0 %v223
    %568 = vmatprep.subr.mxu0 0.0
    %569 = vmatpush1.msra.mxu0 %v222
    %570 = vmatprep.subr.mxu0 0.0
    %571 = vmatpush2.msra.mxu0 0.0
    %572 = vmatprep.subr.mxu0 0.0
    %573 = vmatpush2.msra.mxu0 0.0
    %574 = vmatprep.subr.mxu0 0.0
    %575 = vmatpush2.msra.mxu0 0.0
    %576 = vmatprep.subr.mxu0 0.0
    %577 = vmatpush2.msra.mxu0 0.0
    %578 = vmatprep.subr.mxu0 0.0
    %579 = vmatpush2.msra.mxu0 0.0
    %580 = vmatprep.subr.mxu0 0.0
    %581 = vmatpush2.msra.mxu0 0.0
    %582 = vmatprep.subr.mxu0 0.0
    %583 = vmatpush2.msra.mxu0 0.0
    %584 = vmatprep.subr.mxu0 0.0
    %585 = vmatpush2.msra.mxu0 0.0
    %586 = vmatprep.subr.mxu0 0.0
    %587 = vmatpush2.msra.mxu0 0.0
    %588 = vmatprep.subr.mxu0 0.0
    %589 = vmatpush2.msra.mxu0 0.0
    %590 = vmatprep.subr.mxu0 0.0
    %591 = vmatpush2.msra.mxu0 0.0
    %592 = vmatprep.subr.mxu0 0.0
    %593 = vmatpush2.msra.mxu0 0.0
    %594 = vmatprep.subr.mxu0 0.0
    %595 = vmatpush2.msra.mxu0 0.0
    %596 = vmatprep.subr.mxu0 0.0
    %597 = vmatpush2.msra.mxu0 0.0
    %598 = vmatprep.subr.mxu0 0.0
    %599 = vmatpush2.msra.mxu0 0.0
    %600 = vmatprep.subr.mxu0 0.0
    %601 = vmatpush2.msra.mxu0 0.0
    %602 = vmatprep.mubr.f32.mxu0 0.0
    %603 = vmatmul.mubr.f32.gmra.mxu0 %v536
    %v604 = vpop.f32.mrf.mxu0
    %v605 = vadd.f32 0.0, %v604
    %v606 = vpop.f32.mrf.mxu0
    %607 = vdwg.mxu0
    %v608 = vadd.f32 %v219, %v605
    %v609 = vtanh.pop %v608
    %v610 = vmul.f32 %v609, 0.5
    %v611 = vadd.f32 %v610, 0.5
    %v612 = vmul.f32 %v611, %v526
    %614 = vrot.lane.b32.xlu0 %v609, 64
    %v615 = vpop.permute.xlu0 %614
    %v617 = vmul.f32 %v611, %v615
    %619 = vrot.lane.b32.xlu0 %v617, 32
    %v620 = vpop.permute.xlu0 %619
    %v622 = vadd.f32 %v612, %v620
    %v623 = vtanh.pop %v622
    %625 = vrot.lane.b32.xlu0 %v623, 64
    %v626 = vpop.permute.xlu0 %625
    %v628 = vmul.f32 %v611, %v626
    %v629 = vld [vmem:[%s1] sm:$0xff]
    %v630 = vld [vmem:[%s5] sm:$0x3f]
    %v631 = vld [vmem:[#allocation7] sm:$0xff]
    %v632 = vld [vmem:[#allocation7 + $0x8] sm:$0xff]
    %v633 = vld [vmem:[#allocation7 + $0x10] sm:$0xff]
    %v634 = vld [vmem:[#allocation7 + $0x18] sm:$0xff]
    %636 = vrot.lane.b32.xlu0 %v628, 32
    %v637 = vpop.permute.xlu0 %636
    %v638 = vsel %vm243, %v637, 0
    %640 = vmatprep.subr.mxu0 0.0
    %641 = vmatpush1.msra.mxu0 0.0
    %642 = vmatprep.subr.mxu0 0.0
    %643 = vmatpush1.msra.mxu0 0.0
    %644 = vmatprep.subr.mxu0 0.0
    %645 = vmatpush1.msra.mxu0 0.0
    %646 = vmatprep.subr.mxu0 0.0
    %647 = vmatpush1.msra.mxu0 0.0
    %648 = vmatprep.subr.mxu0 0.0
    %649 = vmatpush1.msra.mxu0 0.0
    %650 = vmatprep.subr.mxu0 0.0
    %651 = vmatpush1.msra.mxu0 0.0
    %652 = vmatprep.subr.mxu0 0.0
    %653 = vmatpush1.msra.mxu0 0.0
    %654 = vmatprep.subr.mxu0 0.0
    %655 = vmatpush1.msra.mxu0 0.0
    %656 = vmatprep.subr.mxu0 0.0
    %657 = vmatpush1.msra.mxu0 0.0
    %658 = vmatprep.subr.mxu0 0.0
    %659 = vmatpush1.msra.mxu0 0.0
    %660 = vmatprep.subr.mxu0 0.0
    %661 = vmatpush1.msra.mxu0 0.0
    %662 = vmatprep.subr.mxu0 0.0
    %663 = vmatpush1.msra.mxu0 0.0
    %664 = vmatprep.subr.mxu0 0.0
    %665 = vmatpush1.msra.mxu0 %v634
    %666 = vmatprep.subr.mxu0 0.0
    %667 = vmatpush1.msra.mxu0 %v633
    %668 = vmatprep.subr.mxu0 0.0
    %669 = vmatpush1.msra.mxu0 %v632
    %670 = vmatprep.subr.mxu0 0.0
    %671 = vmatpush1.msra.mxu0 %v631
    %672 = vmatprep.subr.mxu0 0.0
    %673 = vmatpush2.msra.mxu0 0.0
    %674 = vmatprep.subr.mxu0 0.0
    %675 = vmatpush2.msra.mxu0 0.0
    %676 = vmatprep.subr.mxu0 0.0
    %677 = vmatpush2.msra.mxu0 0.0
    %678 = vmatprep.subr.mxu0 0.0
    %679 = vmatpush2.msra.mxu0 0.0
    %680 = vmatprep.subr.mxu0 0.0
    %681 = vmatpush2.msra.mxu0 0.0
    %682 = vmatprep.subr.mxu0 0.0
    %683 = vmatpush2.msra.mxu0 0.0
    %684 = vmatprep.subr.mxu0 0.0
    %685 = vmatpush2.msra.mxu0 0.0
    %686 = vmatprep.subr.mxu0 0.0
    %687 = vmatpush2.msra.mxu0 0.0
    %688 = vmatprep.subr.mxu0 0.0
    %689 = vmatpush2.msra.mxu0 0.0
    %690 = vmatprep.subr.mxu0 0.0
    %691 = vmatpush2.msra.mxu0 0.0
    %692 = vmatprep.subr.mxu0 0.0
    %693 = vmatpush2.msra.mxu0 0.0
    %694 = vmatprep.subr.mxu0 0.0
    %695 = vmatpush2.msra.mxu0 0.0
    %696 = vmatprep.subr.mxu0 0.0
    %697 = vmatpush2.msra.mxu0 0.0
    %698 = vmatprep.subr.mxu0 0.0
    %699 = vmatpush2.msra.mxu0 0.0
    %700 = vmatprep.subr.mxu0 0.0
    %701 = vmatpush2.msra.mxu0 0.0
    %702 = vmatprep.subr.mxu0 0.0
    %703 = vmatpush2.msra.mxu0 0.0
    %704 = vmatprep.mubr.f32.mxu0 0.0
    %705 = vmatmul.mubr.f32.gmra.mxu0 %v638
    %v706 = vpop.f32.mrf.mxu0
    %v707 = vadd.f32 0.0, %v706
    %v708 = vpop.f32.mrf.mxu0
    %709 = vdwg.mxu0
    %vm710 = vcmask 48128
    %v712 = vsel %vm710, %v629, 0
    %vm714 = vcmask 1045504
    %v716 = vsel %vm714, %v630, 0
    %718 = vmatprep.subr.mxu0 0.0
    %719 = vmatpush1.msra.mxu0 0.0
    %720 = vmatprep.subr.mxu0 0.0
    %721 = vmatpush1.msra.mxu0 0.0
    %722 = vmatprep.subr.mxu0 0.0
    %723 = vmatpush1.msra.mxu0 0.0
    %724 = vmatprep.subr.mxu0 0.0
    %725 = vmatpush1.msra.mxu0 0.0
    %726 = vmatprep.subr.mxu0 0.0
    %727 = vmatpush1.msra.mxu0 0.0
    %728 = vmatprep.subr.mxu0 0.0
    %729 = vmatpush1.msra.mxu0 0.0
    %730 = vmatprep.subr.mxu0 0.0
    %731 = vmatpush1.msra.mxu0 0.0
    %732 = vmatprep.subr.mxu0 0.0
    %733 = vmatpush1.msra.mxu0 0.0
    %734 = vmatprep.subr.mxu0 0.0
    %735 = vmatpush1.msra.mxu0 0.0
    %736 = vmatprep.subr.mxu0 0.0
    %737 = vmatpush1.msra.mxu0 0.0
    %738 = vmatprep.subr.mxu0 0.0
    %739 = vmatpush1.msra.mxu0 0.0
    %740 = vmatprep.subr.mxu0 0.0
    %741 = vmatpush1.msra.mxu0 0.0
    %742 = vmatprep.subr.mxu0 0.0
    %743 = vmatpush1.msra.mxu0 0.0
    %744 = vmatprep.subr.mxu0 0.0
    %745 = vmatpush1.msra.mxu0 0.0
    %746 = vmatprep.subr.mxu0 0.0
    %747 = vmatpush1.msra.mxu0 0.0
    %748 = vmatprep.subr.mxu0 0.0
    %749 = vmatpush1.msra.mxu0 %v716
    %750 = vmatprep.subr.mxu0 0.0
    %751 = vmatpush2.msra.mxu0 0.0
    %752 = vmatprep.subr.mxu0 0.0
    %753 = vmatpush2.msra.mxu0 0.0
    %754 = vmatprep.subr.mxu0 0.0
    %755 = vmatpush2.msra.mxu0 0.0
    %756 = vmatprep.subr.mxu0 0.0
    %757 = vmatpush2.msra.mxu0 0.0
    %758 = vmatprep.subr.mxu0 0.0
    %759 = vmatpush2.msra.mxu0 0.0
    %760 = vmatprep.subr.mxu0 0.0
    %761 = vmatpush2.msra.mxu0 0.0
    %762 = vmatprep.subr.mxu0 0.0
    %763 = vmatpush2.msra.mxu0 0.0
    %764 = vmatprep.subr.mxu0 0.0
    %765 = vmatpush2.msra.mxu0 0.0
    %766 = vmatprep.subr.mxu0 0.0
    %767 = vmatpush2.msra.mxu0 0.0
    %768 = vmatprep.subr.mxu0 0.0
    %769 = vmatpush2.msra.mxu0 0.0
    %770 = vmatprep.subr.mxu0 0.0
    %771 = vmatpush2.msra.mxu0 0.0
    %772 = vmatprep.subr.mxu0 0.0
    %773 = vmatpush2.msra.mxu0 0.0
    %774 = vmatprep.subr.mxu0 0.0
    %775 = vmatpush2.msra.mxu0 0.0
    %776 = vmatprep.subr.mxu0 0.0
    %777 = vmatpush2.msra.mxu0 0.0
    %778 = vmatprep.subr.mxu0 0.0
    %779 = vmatpush2.msra.mxu0 0.0
    %780 = vmatprep.subr.mxu0 0.0
    %781 = vmatpush2.msra.mxu0 0.0
    %782 = vmatprep.mubr.f32.mxu0 0.0
    %783 = vmatmul.mubr.f32.gmra.mxu0 %v712
    %v784 = vpop.f32.mrf.mxu0
    %v785 = vadd.f32 %v707, %v784
    %v786 = vpop.f32.mrf.mxu0
    %787 = vdwg.mxu0
    %v788 = vld [vmem:[%s7] sm:$0x1]
    %v790 = vlaneseq
    %v791 = vshrl.u32 %v790, 7
    %v792 = vsub.s32 0, %v791
    %v793 = vrot.slane %v788, %v792
    %v795 = vadd.f32 %v785, %v793
    %v796 = vmax.f32 %v795, 0.0
    %v797 = vld [vmem:[%s8] sm:$0xff]
    %v798 = vld [vmem:[%s8 + $0x8] sm:$0xff]
    %v799 = vld [vmem:[%s8 + $0x10] sm:$0xff]
    %v800 = vld [vmem:[%s8 + $0x18] sm:$0xff]
    %v801 = vld [vmem:[%s8 + $0x20] sm:$0xff]
    %v802 = vld [vmem:[%s8 + $0x28] sm:$0xff]
    %v803 = vld [vmem:[%s8 + $0x30] sm:$0xff]
    %v804 = vld [vmem:[%s8 + $0x38] sm:$0xff]
    %v805 = vld [vmem:[%s9] sm:$0x1]
    %v807 = vlaneseq
    %v808 = vshrl.u32 %v807, 7
    %v809 = vsub.s32 0, %v808
    %v810 = vrot.slane %v805, %v809
    %vm812 = vcmask 523264
    %v814 = vsel %vm812, %v796, 0
    %816 = vmatprep.subr.mxu0 0.0
    %817 = vmatpush1.msra.mxu0 0.0
    %818 = vmatprep.subr.mxu0 0.0
    %819 = vmatpush1.msra.mxu0 0.0
    %820 = vmatprep.subr.mxu0 0.0
    %821 = vmatpush1.msra.mxu0 0.0
    %822 = vmatprep.subr.mxu0 0.0
    %823 = vmatpush1.msra.mxu0 0.0
    %824 = vmatprep.subr.mxu0 0.0
    %825 = vmatpush1.msra.mxu0 0.0
    %826 = vmatprep.subr.mxu0 0.0
    %827 = vmatpush1.msra.mxu0 0.0
    %828 = vmatprep.subr.mxu0 0.0
    %829 = vmatpush1.msra.mxu0 0.0
    %830 = vmatprep.subr.mxu0 0.0
    %831 = vmatpush1.msra.mxu0 0.0
    %832 = vmatprep.subr.mxu0 0.0
    %833 = vmatpush1.msra.mxu0 %v804
    %834 = vmatprep.subr.mxu0 0.0
    %835 = vmatpush1.msra.mxu0 %v803
    %836 = vmatprep.subr.mxu0 0.0
    %837 = vmatpush1.msra.mxu0 %v802
    %838 = vmatprep.subr.mxu0 0.0
    %839 = vmatpush1.msra.mxu0 %v801
    %840 = vmatprep.subr.mxu0 0.0
    %841 = vmatpush1.msra.mxu0 %v800
    %842 = vmatprep.subr.mxu0 0.0
    %843 = vmatpush1.msra.mxu0 %v799
    %844 = vmatprep.subr.mxu0 0.0
    %845 = vmatpush1.msra.mxu0 %v798
    %846 = vmatprep.subr.mxu0 0.0
    %847 = vmatpush1.msra.mxu0 %v797
    %848 = vmatprep.subr.mxu0 0.0
    %849 = vmatpush2.msra.mxu0 0.0
    %850 = vmatprep.subr.mxu0 0.0
    %851 = vmatpush2.msra.mxu0 0.0
    %852 = vmatprep.subr.mxu0 0.0
    %853 = vmatpush2.msra.mxu0 0.0
    %854 = vmatprep.subr.mxu0 0.0
    %855 = vmatpush2.msra.mxu0 0.0
    %856 = vmatprep.subr.mxu0 0.0
    %857 = vmatpush2.msra.mxu0 0.0
    %858 = vmatprep.subr.mxu0 0.0
    %859 = vmatpush2.msra.mxu0 0.0
    %860 = vmatprep.subr.mxu0 0.0
    %861 = vmatpush2.msra.mxu0 0.0
    %862 = vmatprep.subr.mxu0 0.0
    %863 = vmatpush2.msra.mxu0 0.0
    %864 = vmatprep.subr.mxu0 0.0
    %865 = vmatpush2.msra.mxu0 0.0
    %866 = vmatprep.subr.mxu0 0.0
    %867 = vmatpush2.msra.mxu0 0.0
    %868 = vmatprep.subr.mxu0 0.0
    %869 = vmatpush2.msra.mxu0 0.0
    %870 = vmatprep.subr.mxu0 0.0
    %871 = vmatpush2.msra.mxu0 0.0
    %872 = vmatprep.subr.mxu0 0.0
    %873 = vmatpush2.msra.mxu0 0.0
    %874 = vmatprep.subr.mxu0 0.0
    %875 = vmatpush2.msra.mxu0 0.0
    %876 = vmatprep.subr.mxu0 0.0
    %877 = vmatpush2.msra.mxu0 0.0
    %878 = vmatprep.subr.mxu0 0.0
    %879 = vmatpush2.msra.mxu0 0.0
    %880 = vmatprep.mubr.f32.mxu0 0.0
    %881 = vmatmul.mubr.f32.gmra.mxu0 %v814
    %v882 = vpop.f32.mrf.mxu0
    %v883 = vadd.f32 %v810, %v882
    %v884 = vpop.f32.mrf.mxu0
    %885 = vdwg.mxu0
    %v886 = vmax.f32 %v883, 0.0
    %v887 = vld [vmem:[#allocation8] sm:$0xff]
    %v888 = vld [vmem:[#allocation8 + $0x8] sm:$0xff]
    %v889 = vld [vmem:[#allocation8 + $0x10] sm:$0xff]
    %v890 = vld [vmem:[#allocation8 + $0x18] sm:$0xff]
    %v891 = vld [vmem:[#allocation2] sm:$0x1]
    %v893 = vlaneseq
    %v894 = vshrl.u32 %v893, 7
    %v895 = vsub.s32 0, %v894
    %v896 = vrot.slane %v891, %v895
    %v899 = vsel %vm243, %v886, 0
    %901 = vmatprep.subr.mxu0 0.0
    %902 = vmatpush1.msra.mxu0 0.0
    %903 = vmatprep.subr.mxu0 0.0
    %904 = vmatpush1.msra.mxu0 0.0
    %905 = vmatprep.subr.mxu0 0.0
    %906 = vmatpush1.msra.mxu0 0.0
    %907 = vmatprep.subr.mxu0 0.0
    %908 = vmatpush1.msra.mxu0 0.0
    %909 = vmatprep.subr.mxu0 0.0
    %910 = vmatpush1.msra.mxu0 0.0
    %911 = vmatprep.subr.mxu0 0.0
    %912 = vmatpush1.msra.mxu0 0.0
    %913 = vmatprep.subr.mxu0 0.0
    %914 = vmatpush1.msra.mxu0 0.0
    %915 = vmatprep.subr.mxu0 0.0
    %916 = vmatpush1.msra.mxu0 0.0
    %917 = vmatprep.subr.mxu0 0.0
    %918 = vmatpush1.msra.mxu0 0.0
    %919 = vmatprep.subr.mxu0 0.0
    %920 = vmatpush1.msra.mxu0 0.0
    %921 = vmatprep.subr.mxu0 0.0
    %922 = vmatpush1.msra.mxu0 0.0
    %923 = vmatprep.subr.mxu0 0.0
    %924 = vmatpush1.msra.mxu0 0.0
    %925 = vmatprep.subr.mxu0 0.0
    %926 = vmatpush1.msra.mxu0 %v890
    %927 = vmatprep.subr.mxu0 0.0
    %928 = vmatpush1.msra.mxu0 %v889
    %929 = vmatprep.subr.mxu0 0.0
    %930 = vmatpush1.msra.mxu0 %v888
    %931 = vmatprep.subr.mxu0 0.0
    %932 = vmatpush1.msra.mxu0 %v887
    %933 = vmatprep.subr.mxu0 0.0
    %934 = vmatpush2.msra.mxu0 0.0
    %935 = vmatprep.subr.mxu0 0.0
    %936 = vmatpush2.msra.mxu0 0.0
    %937 = vmatprep.subr.mxu0 0.0
    %938 = vmatpush2.msra.mxu0 0.0
    %939 = vmatprep.subr.mxu0 0.0
    %940 = vmatpush2.msra.mxu0 0.0
    %941 = vmatprep.subr.mxu0 0.0
    %942 = vmatpush2.msra.mxu0 0.0
    %943 = vmatprep.subr.mxu0 0.0
    %944 = vmatpush2.msra.mxu0 0.0
    %945 = vmatprep.subr.mxu0 0.0
    %946 = vmatpush2.msra.mxu0 0.0
    %947 = vmatprep.subr.mxu0 0.0
    %948 = vmatpush2.msra.mxu0 0.0
    %949 = vmatprep.subr.mxu0 0.0
    %950 = vmatpush2.msra.mxu0 0.0
    %951 = vmatprep.subr.mxu0 0.0
    %952 = vmatpush2.msra.mxu0 0.0
    %953 = vmatprep.subr.mxu0 0.0
    %954 = vmatpush2.msra.mxu0 0.0
    %955 = vmatprep.subr.mxu0 0.0
    %956 = vmatpush2.msra.mxu0 0.0
    %957 = vmatprep.subr.mxu0 0.0
    %958 = vmatpush2.msra.mxu0 0.0
    %959 = vmatprep.subr.mxu0 0.0
    %960 = vmatpush2.msra.mxu0 0.0
    %961 = vmatprep.subr.mxu0 0.0
    %962 = vmatpush2.msra.mxu0 0.0
    %963 = vmatprep.subr.mxu0 0.0
    %964 = vmatpush2.msra.mxu0 0.0
    %965 = vmatprep.mubr.f32.mxu0 0.0
    %966 = vmatmul.mubr.f32.gmra.mxu0 %v899
    %v967 = vpop.f32.mrf.mxu0
    %v968 = vadd.f32 %v896, %v967
    %v969 = vpop.f32.mrf.mxu0
    %970 = vdwg.mxu0
    %vm971 = vcmask 7168
    %972 = vst.msk [vmem:[%s12] sm:$0xff] %vm971, %v968
    // Predicated region
    $region66: #{fwd.1} parent=1 // pred_check
      _
    $region67: #{fwd.1} parent=1 // pred_check_branch
      %974 = sbr.rel (0) target = $region69
    $region68: #{fwd.1} parent=1 // pred_region
      _
    $region69: #{fwd.1} parent=1 // pred_fallthru
      _
    // Predicated region
    $region70: #{fwd.1} parent=1 // pred_check
      _
    $region71: #{fwd.1} parent=1 // pred_check_branch
      %976 = sbr.rel (0) target = $region73
    $region72: #{fwd.1} parent=1 // pred_region
      _
    $region73: #{fwd.1} parent=1 // pred_fallthru
      _
    %977 = vsyncpa [#allocation4], 1
    %978 = vsyncpa [#allocation6], 1
    %979 = vsyncpa [#allocation9], 1

</llo_original>
